<compile_context>
chip_gen: v5e
topology: v5e:2x2
jax: 0.10.0
libtpu: 0.0.40
codegen_flags: <defaults>
</compile_context>

<pallas_src>
import math

import jax
import jax.numpy as jnp
from jax.experimental import pallas as pl
from jax.experimental.pallas import tpu as pltpu


def _round_up(x, m):
    return ((x + m - 1) // m) * m


def _sgc_kernel(x_ref, w_ref, b_ref, o_ref):
    # One row tile: y = x @ W.T + b, f32 accumulation on the MXU.
    acc = jnp.dot(x_ref[...], w_ref[...], preferred_element_type=jnp.float32)
    o_ref[...] = (acc + b_ref[...]).astype(o_ref.dtype)


def _derive_tile_m(nfeat, nclass, in_itemsize, out_itemsize,
                   vmem_budget_bytes=32 * 1024 * 1024, max_tile=1024):
    """Largest row tile whose double-buffered working set fits the VMEM budget."""
    # Resident (constant-index) W + bias; counted x2 for the default double buffer.
    fixed = 2 * (nfeat * nclass * in_itemsize + nclass * 4)
    # Double-buffered x tile + double-buffered out tile, per row.
    per_row = 2 * nfeat * in_itemsize + 2 * nclass * out_itemsize
    tile = (vmem_budget_bytes - fixed) // max(per_row, 1)
    tile = max(8, min(int(tile), max_tile))
    return (tile // 8) * 8


def sgc_forward(x, w_t, b, *, tile_m=None, use_bf16_inputs=False):
    """SGC forward (== nn.Linear): y = x @ W.T + b.

    x:   [N, nfeat]        (k-step propagated node features)
    w_t: [nfeat, nclass]   (transposed nn.Linear weight)
    b:   [nclass]
    tile_m: row tile; None -> derived from a VMEM budget.
    use_bf16_inputs: cast x / w_t to bf16 (f32 accumulation, f32 bias) to halve
                     the dominant HBM stream on v6e/v7x. Off by default.
    """
    n, nfeat = x.shape
    nclass = w_t.shape[1]
    out_dtype = x.dtype

    x_in = x.astype(jnp.bfloat16) if use_bf16_inputs else x
    w_in = w_t.astype(jnp.bfloat16) if use_bf16_inputs else w_t
    b_2d = b.astype(jnp.float32).reshape(1, nclass)   # f32 bias, cast once here

    in_isz = jnp.dtype(x_in.dtype).itemsize
    out_isz = jnp.dtype(out_dtype).itemsize

    auto_tile = tile_m is None
    if auto_tile:
        tile_m = _derive_tile_m(nfeat, nclass, in_isz, out_isz)

    if tile_m >= n:
        tile_m = n            # single tile; block dim == full array dim is legal
        grid_m = 1
    else:
        tile_m = max(8, (tile_m // 8) * 8)     # sublane-legal tile
        grid_m = pl.cdiv(n, tile_m)
        if auto_tile and grid_m > 1 and grid_m % 2 == 1:
            # Even tile count -> even split across v7x's two TensorCores.
            tile_m = _round_up(pl.cdiv(n, grid_m + 1), 8)
            grid_m = pl.cdiv(n, tile_m)

    cost = pl.CostEstimate(
        flops=2 * n * nfeat * nclass,
        transcendentals=0,
        bytes_accessed=(x_in.size * in_isz
                        + w_in.size * jnp.dtype(w_in.dtype).itemsize
                        + b_2d.size * 4
                        + n * nclass * out_isz),
    )

    out = pl.pallas_call(
        _sgc_kernel,
        out_shape=jax.ShapeDtypeStruct((n, nclass), out_dtype),
        grid_spec=pltpu.PrefetchScalarGridSpec(
            num_scalar_prefetch=0,
            grid=(grid_m,),
            in_specs=[
                pl.BlockSpec((tile_m, nfeat), lambda i: (i, 0)),    # streamed x rows (unpadded)
                pl.BlockSpec((nfeat, nclass), lambda i: (0, 0)),    # resident W.T
                pl.BlockSpec((1, nclass), lambda i: (0, 0)),        # resident bias
            ],
            out_specs=pl.BlockSpec((tile_m, nclass), lambda i: (i, 0)),
        ),
        compiler_params=pltpu.CompilerParams(
            dimension_semantics=("parallel",),     # rows independent -> megacore / v7x 2-TC
            vmem_limit_bytes=48 * 1024 * 1024,     # > v5e's 16 MiB default, < v7x's 64 MiB physical
        ),
        cost_estimate=cost,
    )(x_in, w_in, b_2d)

    return out


# TODO(synk): for nfeat >~ 64K, add a K grid axis ("arbitrary", last) with an f32
# VMEM accumulator + pl.when init/finalize so the full-K W / x row blocks need not
# be VMEM-resident; unnecessary at SGC-typical feature widths.


if __name__ == "__main__":
    # Small shapes consistent with the module: nfeat=32 features, nclass=8 classes.
    # N=20 with an explicit tile_m=8 exercises a multi-tile row grid with a
    # ragged (masked) last tile.
    N, NFEAT, NCLASS = 20, 32, 8

    key = jax.random.PRNGKey(0)
    kx, kw, kb = jax.random.split(key, 3)

    # Deterministic init mimicking nn.Linear's uniform(-1/sqrt(nfeat), +1/sqrt(nfeat)).
    bound = 1.0 / math.sqrt(NFEAT)
    W = jax.random.uniform(kw, (NCLASS, NFEAT), jnp.float32, -bound, bound)  # torch [out, in]
    b = jax.random.uniform(kb, (NCLASS,), jnp.float32, -bound, bound)
    x = jax.random.normal(kx, (N, NFEAT), jnp.float32)

    w_t = W.T  # [NFEAT, NCLASS], glue in plain JAX

    out = sgc_forward(x, w_t, b, tile_m=8)
    jax.block_until_ready(out)

    # Reference check against plain JAX (same math as torch's F.linear).
    ref = x @ W.T + b
    assert out.shape == (N, NCLASS)
    assert jnp.allclose(out, ref, atol=1e-5, rtol=1e-5), "mismatch vs reference"

    print("KERNEL_OK")
</pallas_src>

<mosaic_0001>
module attributes {stable_mosaic.version = 11 : i64} {
  func.func @_sgc_kernel(%arg0: i32, %arg1: memref<8x32xf32, #tpu.memory_space<vmem>>, %arg2: memref<32x8xf32, #tpu.memory_space<vmem>>, %arg3: memref<1x8xf32, #tpu.memory_space<vmem>>, %arg4: memref<8x8xf32, #tpu.memory_space<vmem>>) attributes {dimension_semantics = [#tpu.dimension_semantics<parallel>], iteration_bounds = array<i64: 3>, scalar_prefetch = 0 : i64, scratch_operands = 0 : i64, tpu.core_type = #tpu.core_type<tc>, window_params = [{transform_indices = @transform_0, window_bounds = array<i64: 8, 32>}, {pipeline_mode = #tpu.pipeline_mode<synchronous>, transform_indices = @transform_1, window_bounds = array<i64: 32, 8>}, {pipeline_mode = #tpu.pipeline_mode<synchronous>, transform_indices = @transform_2, window_bounds = array<i64: 1, 8>}, {transform_indices = @transform_3, window_bounds = array<i64: 8, 8>}]} {
    %c0 = arith.constant 0 : index
    %c0_0 = arith.constant 0 : index
    %0 = vector.load %arg1[%c0, %c0_0] : memref<8x32xf32, #tpu.memory_space<vmem>>, vector<8x32xf32>
    %c0_1 = arith.constant 0 : index
    %c0_2 = arith.constant 0 : index
    %1 = vector.load %arg2[%c0_1, %c0_2] : memref<32x8xf32, #tpu.memory_space<vmem>>, vector<32x8xf32>
    %cst = arith.constant dense<0.000000e+00> : vector<8x8xf32>
    %2 = tpu.matmul %0, %1, %cst {dimension_numbers = #tpu.dot_dimension_numbers<[1], [0], [0], [1], [0, 0, 1, 1], [], []>} : vector<8x32xf32>, vector<32x8xf32>, vector<8x8xf32> -> vector<8x8xf32>
    %c0_3 = arith.constant 0 : index
    %c0_4 = arith.constant 0 : index
    %3 = vector.load %arg3[%c0_3, %c0_4] : memref<1x8xf32, #tpu.memory_space<vmem>>, vector<1x8xf32>
    %4 = vector.broadcast %3 : vector<1x8xf32> to vector<8x8xf32>
    %5 = arith.addf %2, %4 : vector<8x8xf32>
    %c0_5 = arith.constant 0 : index
    %c0_6 = arith.constant 0 : index
    %6 = vector.load %arg4[%c0_5, %c0_6] : memref<8x8xf32, #tpu.memory_space<vmem>>, vector<8x8xf32>
    tpu.vector_store %arg4[%c0_5, %c0_6], %5 {strides = array<i32>} : memref<8x8xf32, #tpu.memory_space<vmem>>, vector<8x8xf32>,
    return
  }
  func.func @transform_0(%arg0: i32) -> (i32, i32) {
    %c0_i32 = arith.constant 0 : i32
    %c0_i32_0 = arith.constant 0 : i32
    return %arg0, %c0_i32 : i32, i32
  }
  func.func @transform_1(%arg0: i32) -> (i32, i32) {
    %c0_i32 = arith.constant 0 : i32
    %c0_i32_0 = arith.constant 0 : i32
    %c0_i32_1 = arith.constant 0 : i32
    return %c0_i32, %c0_i32_0 : i32, i32
  }
  func.func @transform_2(%arg0: i32) -> (i32, i32) {
    %c0_i32 = arith.constant 0 : i32
    %c0_i32_0 = arith.constant 0 : i32
    %c0_i32_1 = arith.constant 0 : i32
    return %c0_i32, %c0_i32_0 : i32, i32
  }
  func.func @transform_3(%arg0: i32) -> (i32, i32) {
    %c0_i32 = arith.constant 0 : i32
    %c0_i32_0 = arith.constant 0 : i32
    return %arg0, %c0_i32 : i32, i32
  }
}

</mosaic_0001>

<llo_original>
// kernel: tpu_custom_call.1
$region0: #{tpu_custom_call.1}
  #allocation0 [shape = 'u32[]', space=smem, size = 0x4, offset = 0x4, fixed_abs, tag = 'smem constant byte address 0x4 - core index']
  #allocation1 [shape = 'u32[72,128]{1,0:T(1,128)}', space=vmem, size = 0x9000, scoped, tag = 'internal scratch']
  %s0 = inlined_call_operand.vmem [shape: f32[20,32], index: 0, kind: input, shape index: {}]
  %s1 = inlined_call_operand.vmem [shape: f32[32,8], index: 1, kind: input, shape index: {}]
  %s2 = inlined_call_operand.vmem [shape: f32[1,8], index: 2, kind: input, shape index: {}]
  %s3 = inlined_call_operand.vmem [shape: f32[20,8], index: 3, kind: output, shape index: {}]
  %s4 = sld [smem:[#allocation0]]
  $region45: #{tpu_custom_call.1} parent=0
    _
  %s6 = ssub.s32 1, %s4
  %s7 = scalar_select 0, %s6, %s4
  loop: start=0, step=1, limit=5
  $region2: #{tpu_custom_call.1} parent=0 // loop_pre_header
    _
  $region3: #{tpu_custom_call.1} parent=0 // loop_header
    %s9 = sphi 0, %s13
    %p10 = scmp.ge.s32.totalorder %s9, 5
    %s19 = sphi 0, %s21
    %s22 = sphi 0, %s19
    %s23 = sphi 0, %s22
    %s39 = sphi 0, %s23
    %s43 = sphi 0, %s43
    %s45 = sphi 0, %s43
    %s46 = sphi 0, %s45
    %s60 = sphi 0, %s46
    %s64 = sphi 0, %s64
    %s66 = sphi 0, %s64
    %s67 = sphi 0, %s66
    %s81 = sphi 0, %s67
    %s87 = sphi 0, %s89
    %s90 = sphi 0, %s87
    %s91 = sphi 0, %s90
    %s107 = sphi 0, %s91
  $region4: #{tpu_custom_call.1} parent=0 // loop_header_branch
    %12 = sbr.rel (%p10) target = $region8
  $region5: #{tpu_custom_call.1} parent=0 // loop_body
    %s14 = ssub.s32 %s9, 1
    %s15 = ssub.s32 %s9, 2
    %s16 = sadd.s32 %s9, 1
    %s17 = ssub.s32 %s9, %s16
    %p18 = scmp.eq.s32.totalorder %s17, 0
    %s20 = sadd.s32 %s19, 1
    %s21 = scalar_select %p18, %s19, %s20
    %p24 = pneg %p18
    %p25 = scmp.eq.s32.totalorder %s9, 2
    %p26 = por %p24, %p25
    %p27 = scmp.ne.s32.totalorder %s19, %s22
    %p28 = scmp.eq.s32.totalorder %s9, 0
    %p29 = por %p27, %p28
    %p30 = scmp.ne.s32.totalorder %s19, %s22
    %p31 = scmp.eq.s32.totalorder %s14, 2
    %p32 = por %p30, %p31
    %p33 = scmp.ne.s32.totalorder %s22, %s23
    %p34 = scmp.eq.s32.totalorder %s14, 0
    %p35 = por %p33, %p34
    %p36 = scmp.ne.s32.totalorder %s22, %s23
    %p37 = scmp.eq.s32.totalorder %s15, 2
    %p38 = por %p36, %p37
    %p40 = scmp.ne.s32.totalorder %s23, %s39
    %p41 = scmp.eq.s32.totalorder %s15, 0
    %p42 = por %p40, %p41
    %s44 = sadd.s32 %s43, 1
    %p47 = scmp.eq.s32.totalorder %s9, 2
    %p48 = scmp.ne.s32.totalorder %s43, %s45
    %p49 = scmp.eq.s32.totalorder %s9, 0
    %p50 = por %p48, %p49
    %p51 = scmp.ne.s32.totalorder %s43, %s45
    %p52 = scmp.eq.s32.totalorder %s14, 2
    %p53 = por %p51, %p52
    %p54 = scmp.ne.s32.totalorder %s45, %s46
    %p55 = scmp.eq.s32.totalorder %s14, 0
    %p56 = por %p54, %p55
    %p57 = scmp.ne.s32.totalorder %s45, %s46
    %p58 = scmp.eq.s32.totalorder %s15, 2
    %p59 = por %p57, %p58
    %p61 = scmp.ne.s32.totalorder %s46, %s60
    %p62 = scmp.eq.s32.totalorder %s15, 0
    %p63 = por %p61, %p62
    %s65 = sadd.s32 %s64, 1
    %p68 = scmp.eq.s32.totalorder %s9, 2
    %p69 = scmp.ne.s32.totalorder %s64, %s66
    %p70 = scmp.eq.s32.totalorder %s9, 0
    %p71 = por %p69, %p70
    %p72 = scmp.ne.s32.totalorder %s64, %s66
    %p73 = scmp.eq.s32.totalorder %s14, 2
    %p74 = por %p72, %p73
    %p75 = scmp.ne.s32.totalorder %s66, %s67
    %p76 = scmp.eq.s32.totalorder %s14, 0
    %p77 = por %p75, %p76
    %p78 = scmp.ne.s32.totalorder %s66, %s67
    %p79 = scmp.eq.s32.totalorder %s15, 2
    %p80 = por %p78, %p79
    %p82 = scmp.ne.s32.totalorder %s67, %s81
    %p83 = scmp.eq.s32.totalorder %s15, 0
    %p84 = por %p82, %p83
    %s85 = ssub.s32 %s9, %s16
    %p86 = scmp.eq.s32.totalorder %s85, 0
    %s88 = sadd.s32 %s87, 1
    %s89 = scalar_select %p86, %s87, %s88
    %p92 = pneg %p86
    %p93 = scmp.eq.s32.totalorder %s9, 2
    %p94 = por %p92, %p93
    %p95 = scmp.ne.s32.totalorder %s87, %s90
    %p96 = scmp.eq.s32.totalorder %s9, 0
    %p97 = por %p95, %p96
    %p98 = scmp.ne.s32.totalorder %s87, %s90
    %p99 = scmp.eq.s32.totalorder %s14, 2
    %p100 = por %p98, %p99
    %p101 = scmp.ne.s32.totalorder %s90, %s91
    %p102 = scmp.eq.s32.totalorder %s14, 0
    %p103 = por %p101, %p102
    %p104 = scmp.ne.s32.totalorder %s90, %s91
    %p105 = scmp.eq.s32.totalorder %s15, 2
    %p106 = por %p104, %p105
    %p108 = scmp.ne.s32.totalorder %s91, %s107
    %p109 = scmp.eq.s32.totalorder %s15, 0
    %p110 = por %p108, %p109
    %p111 = scmp.le.s32.totalorder 1, %s9
    %p112 = scmp.lt.s32.totalorder %s9, 4
    %p113 = pnand %p111, %p112
    %p114 = pneg %p113
    // Predicated region
    $region9: #{tpu_custom_call.1} parent=5 // pred_check
      _
    $region10: #{tpu_custom_call.1} parent=5 // pred_check_branch
      %116 = sbr.rel (%p113) target = $region12
    $region11: #{tpu_custom_call.1} parent=5 // pred_region
      %s117 = ssub.s32 %s9, 1
      // Predicated region
      $region13: #{tpu_custom_call.1} parent=11 // pred_check
        %p118 = pneg %p56
      $region14: #{tpu_custom_call.1} parent=11 // pred_check_branch
        %120 = sbr.rel (%p118) target = $region16
      $region15: #{tpu_custom_call.1} parent=11 // pred_region
        _
      $region16: #{tpu_custom_call.1} parent=11 // pred_fallthru
        _
      // Predicated region
      $region17: #{tpu_custom_call.1} parent=11 // pred_check
        %p121 = pneg %p77
      $region18: #{tpu_custom_call.1} parent=11 // pred_check_branch
        %123 = sbr.rel (%p121) target = $region20
      $region19: #{tpu_custom_call.1} parent=11 // pred_region
        _
      $region20: #{tpu_custom_call.1} parent=11 // pred_fallthru
        _
    $region12: #{tpu_custom_call.1} parent=5 // pred_fallthru
      _
    %p124 = scmp.lt.s32.totalorder %s9, 3
    // Predicated region
    $region21: #{tpu_custom_call.1} parent=5 // pred_check
      %p125 = pneg %p124
    $region22: #{tpu_custom_call.1} parent=5 // pred_check_branch
      %127 = sbr.rel (%p125) target = $region24
    $region23: #{tpu_custom_call.1} parent=5 // pred_region
      // Predicated region
      $region25: #{tpu_custom_call.1} parent=23 // pred_check
        %p128 = pneg %p29
      $region26: #{tpu_custom_call.1} parent=23 // pred_check_branch
        %130 = sbr.rel (%p128) target = $region28
      $region27: #{tpu_custom_call.1} parent=23 // pred_region
        %p131 = scmp.lt.s32.totalorder %s9, 2
        %s132 = scalar_select %p131, %s9, 2
        %s133 = smul.addr %s132, 8
        %s134 = scalar_lea.vmem %s0, %s133
      $region28: #{tpu_custom_call.1} parent=23 // pred_fallthru
        _
    $region24: #{tpu_custom_call.1} parent=5 // pred_fallthru
      _
    %p135 = scmp.le.s32.totalorder 1, %s9
    %p136 = scmp.lt.s32.totalorder %s9, 4
    %p137 = pnand %p135, %p136
    %p138 = pneg %p137
    // Predicated region
    $region29: #{tpu_custom_call.1} parent=5 // pred_check
      _
    $region30: #{tpu_custom_call.1} parent=5 // pred_check_branch
      %140 = sbr.rel (%p137) target = $region32
    $region31: #{tpu_custom_call.1} parent=5 // pred_region
      %s141 = ssub.s32 %s9, 1
      %p142 = scmp.lt.s32.totalorder %s14, 2
      %s143 = scalar_select %p142, %s14, 2
      %s144 = smul.addr %s143, 8
      %s145 = scalar_lea.vmem %s0, %s144
      %p146 = pneg %p35
      %p147 = pneg %p32
      %p148 = pneg %p56
      %p149 = pneg %p53
      %p150 = pneg %p77
      %p151 = pneg %p74
      %p152 = pneg %p103
      %p153 = pneg %p100
      %p154 = scmp.lt.s32.totalorder %s14, 2
      %s155 = scalar_select %p154, %s14, 2
      %s156 = smul.addr %s155, 8
      %s157 = scalar_lea.vmem %s3, %s156
      %p158 = scmp.lt.s32.totalorder %s14, 2
      %s159 = scalar_select %p158, %s14, 2
      %s160 = smul.addr %s159, 8
      %s161 = scalar_lea.vmem %s0, %s160
      %p162 = scmp.lt.s32.totalorder %s14, 2
      %s163 = scalar_select %p162, %s14, 2
      %s164 = smul.addr %s163, 8
      %s165 = scalar_lea.vmem %s3, %s164
      %v166 = vld [vmem:[%s161] sm:$0xff]
      %v167 = vld [vmem:[%s1] sm:$0xff]
      %v168 = vld [vmem:[%s1 + $0x8] sm:$0xff]
      %v169 = vld [vmem:[%s1 + $0x10] sm:$0xff]
      %v170 = vld [vmem:[%s1 + $0x18] sm:$0xff]
      %v171 = vld [vmem:[%s2] sm:$0x1]
      %v173 = vperm.slane %v171, 0
      %vm175 = vcmask 261120
      %v177 = vsel %vm175, %v166, 0
      %179 = vmatpush.msra.mxu0 0.0
      %180 = vmatpush.msra.mxu0 0.0
      %181 = vmatpush.msra.mxu0 0.0
      %182 = vmatpush.msra.mxu0 0.0
      %183 = vmatpush.msra.mxu0 0.0
      %184 = vmatpush.msra.mxu0 0.0
      %185 = vmatpush.msra.mxu0 0.0
      %186 = vmatpush.msra.mxu0 0.0
      %187 = vmatpush.msra.mxu0 0.0
      %188 = vmatpush.msra.mxu0 0.0
      %189 = vmatpush.msra.mxu0 0.0
      %190 = vmatpush.msra.mxu0 0.0
      %191 = vmatpush.msra.mxu0 %v170
      %192 = vmatpush.msra.mxu0 %v169
      %193 = vmatpush.msra.mxu0 %v168
      %194 = vmatpush.msra.mxu0 %v167
      %195 = vmatmul.f32.gmra.mxu0 %v177
      %v196 = vpop.f32.mrf.mxu0
      %v197 = vadd.f32 %v173, %v196
      %198 = vdwg.mxu0
      %vm199 = vcmask 64512
      %200 = vst.msk [vmem:[%s165] sm:$0xff] %vm199, %v197
      %p201 = scmp.lt.s32.totalorder %s14, 2
      %s202 = scalar_select %p201, %s14, 2
      %s203 = smul.addr %s202, 8
      %s204 = scalar_lea.vmem %s3, %s203
      // Predicated region
      $region33: #{tpu_custom_call.1} parent=31 // pred_check
        %p205 = pneg %p100
      $region34: #{tpu_custom_call.1} parent=31 // pred_check_branch
        %207 = sbr.rel (%p205) target = $region36
      $region35: #{tpu_custom_call.1} parent=31 // pred_region
        _
      $region36: #{tpu_custom_call.1} parent=31 // pred_fallthru
        _
    $region32: #{tpu_custom_call.1} parent=5 // pred_fallthru
      _
    %p208 = scmp.le.s32.totalorder 2, %s9
    // Predicated region
    $region37: #{tpu_custom_call.1} parent=5 // pred_check
      %p209 = pneg %p208
    $region38: #{tpu_custom_call.1} parent=5 // pred_check_branch
      %211 = sbr.rel (%p209) target = $region40
    $region39: #{tpu_custom_call.1} parent=5 // pred_region
      %s212 = ssub.s32 %s9, 2
      // Predicated region
      $region41: #{tpu_custom_call.1} parent=39 // pred_check
        %p213 = pneg %p106
      $region42: #{tpu_custom_call.1} parent=39 // pred_check_branch
        %215 = sbr.rel (%p213) target = $region44
      $region43: #{tpu_custom_call.1} parent=39 // pred_region
        %p216 = scmp.lt.s32.totalorder %s15, 2
        %s217 = scalar_select %p216, %s15, 2
        %s218 = smul.addr %s217, 8
        %s219 = scalar_lea.vmem %s3, %s218
      $region44: #{tpu_custom_call.1} parent=39 // pred_fallthru
        _
    $region40: #{tpu_custom_call.1} parent=5 // pred_fallthru
      _
  $region6: #{tpu_custom_call.1} parent=0 // loop_footer
    %s13 = sadd.s32 1, %s9
  $region7: #{tpu_custom_call.1} parent=0 // loop_footer_branch
    %8 = sbr.rel target = $region3
  $region8: #{tpu_custom_call.1} parent=0 // loop_exit
    _

</llo_original>
